<compile_context>
chip_gen: v7x
topology: tpu7x:2x2x1
jax: 0.10.0
libtpu: 0.0.40
codegen_flags: <defaults>
</compile_context>

<pallas_src>
import math

import jax
import jax.numpy as jnp
from jax.experimental import pallas as pl
from jax.experimental.pallas import tpu as pltpu

_HIGHEST = jax.lax.Precision.HIGHEST


# ---------------------------------------------------------------------------
# Shared helpers: VMEM budget / batch-tile selection
# ---------------------------------------------------------------------------
def _round_up(x, m):
    return ((x + m - 1) // m) * m


def _vmem_caps():
    """(tile-sizing budget, compiler vmem_limit_bytes) per TPU generation."""
    try:
        cap = int(pltpu.get_tpu_info().vmem_capacity_bytes)
    except Exception:
        cap = 64 * 1024 * 1024          # unknown platform -> assume v7x (smallest)
    cap = max(cap, 32 * 1024 * 1024)
    return cap // 2, (cap * 3) // 4     # 64/96 MiB on v5e/v6e, 32/48 MiB on v7x


def _pick_batch_tile(B, per_col_bytes, fixed_bytes, budget_bytes):
    if B <= 8:
        return B                        # block dim == full array dim is allowed
    avail = max(budget_bytes - fixed_bytes, per_col_bytes)
    tb = max(1, avail // max(per_col_bytes, 1))
    # keep at least two batch tiles so v7x's second TensorCore gets work on the
    # "parallel" batch axis (cheap on 1-TC chips, ~2x when compute-bound on v7x)
    tb = min(tb, _round_up(-(-B // 2), 8))
    if tb >= B:
        return B
    return max(8, (tb // 8) * 8)


# ---------------------------------------------------------------------------
# 1. SimpleAttention (context attention) kernel
# ---------------------------------------------------------------------------
def _make_attention_kernel(S, chunk, with_alpha):
    n_full = S // chunk
    rem = S - n_full * chunk

    def kernel(m_ref, w_ref, *rest):
        if with_alpha:
            pool_ref, alpha_ref, scale_sc = rest
        else:
            (pool_ref, scale_sc) = rest
            alpha_ref = None
        tb, D = m_ref.shape[1], m_ref.shape[2]
        w = w_ref[...].astype(jnp.float32)                      # (1, D)

        # ---- pass 1: logits scale[s, b] = sum_d M[s, b, d] * w[d] ----
        def write_logits(s0, size):
            blk = m_ref[pl.ds(s0, size)].astype(jnp.float32)    # (size, tb, D)
            scale_sc[pl.ds(s0, size), :] = jnp.sum(blk * w[None], axis=-1)

        if n_full > 0:
            def logit_body(c, carry):
                write_logits(pl.multiple_of(c * chunk, chunk), chunk)
                return carry
            jax.lax.fori_loop(0, n_full, logit_body, 0, unroll=n_full <= 8)
        if rem > 0:
            write_logits(n_full * chunk, rem)

        # ---- softmax over the sequence axis (PyTorch softmax(dim=0)) ----
        scale = scale_sc[...]                                   # (S, tb) f32
        m_max = jnp.max(scale, axis=0, keepdims=True)
        expv = jnp.exp(scale - m_max)
        denom = jnp.sum(expv, axis=0, keepdims=True)
        inv_denom = pl.reciprocal(denom, approx=False)

        # ---- pass 2: alpha-weighted pooling, chunked to bound live values ----
        def pool_piece(s0, size, acc):
            blk = m_ref[pl.ds(s0, size)].astype(jnp.float32)
            a = jnp.exp(scale_sc[pl.ds(s0, size)] - m_max) * inv_denom
            return acc + jnp.sum(a[:, :, None] * blk, axis=0)

        acc = jnp.zeros((tb, D), jnp.float32)
        if n_full > 0:
            acc = jax.lax.fori_loop(
                0, n_full,
                lambda c, a_: pool_piece(pl.multiple_of(c * chunk, chunk), chunk, a_),
                acc, unroll=n_full <= 8)
        if rem > 0:
            acc = pool_piece(n_full * chunk, rem, acc)

        pool_ref[...] = acc.astype(pool_ref.dtype)
        if with_alpha:
            alpha = expv * inv_denom                            # (S, tb)
            alpha_ref[...] = jnp.transpose(alpha, (1, 0)).astype(alpha_ref.dtype)

    return kernel


def simple_attention(M, w, *, with_alpha=True, batch_tile=None):
    """M: (seq_len, batch, dim); w: (1, dim).

    Returns (attn_pool (B, D), alpha (B, 1, S)) like the PyTorch module, or
    just attn_pool when with_alpha=False (skips that HBM writeback).
    """
    S, B, D = M.shape
    budget, vmem_limit = _vmem_caps()
    item = M.dtype.itemsize
    per_col = (2 * S * D * item                     # double-buffered input block
               + 4 * S + 8 * S                      # logit scratch + live exp values
               + 2 * (4 * D + (4 * S if with_alpha else 0)))
    tb = batch_tile if batch_tile is not None else _pick_batch_tile(
        B, per_col, 2 * 4 * D, budget)
    nb = pl.cdiv(B, tb)
    chunk = 8 if S >= 8 else S

    in_specs = [pl.BlockSpec((S, tb, D), lambda b: (0, b, 0)),   # native layout
                pl.BlockSpec((1, D), lambda b: (0, 0))]
    pool_spec = pl.BlockSpec((tb, D), lambda b: (b, 0))
    pool_shape = jax.ShapeDtypeStruct((B, D), M.dtype)
    if with_alpha:
        out_specs = (pool_spec, pl.BlockSpec((tb, S), lambda b: (b, 0)))
        out_shape = (pool_shape, jax.ShapeDtypeStruct((B, S), M.dtype))
    else:
        out_specs = pool_spec
        out_shape = pool_shape

    out = pl.pallas_call(
        _make_attention_kernel(S, chunk, with_alpha),
        out_shape=out_shape,
        grid=(nb,),
        in_specs=in_specs,
        out_specs=out_specs,
        scratch_shapes=[pltpu.VMEM((S, tb), jnp.float32)],       # cached logits
        compiler_params=pltpu.CompilerParams(
            dimension_semantics=("parallel",),
            vmem_limit_bytes=vmem_limit),
    )(M, w)

    if with_alpha:
        pool, alpha = out
        return pool, alpha[:, None, :]                           # (B, 1, S)
    return out


def _simple_attention_reference(M, w):
    scale = jnp.einsum("sbd,od->sbo", M, w, precision=_HIGHEST)
    alpha = jax.nn.softmax(scale, axis=0)
    alpha = jnp.transpose(alpha, (1, 2, 0))
    pool = jnp.einsum("bos,bsd->bod", alpha, jnp.transpose(M, (1, 0, 2)),
                      precision=_HIGHEST)[:, 0, :]
    return pool, alpha


# ---------------------------------------------------------------------------
# 2. Fused DialogueRNN forward (context_attention='simple', party_attention=None)
# ---------------------------------------------------------------------------
def _gru_step(x, h, w_in, w_hh, b_in, b_hh, *, H, precision):
    """Fused GRUCell: one input dot + one hidden dot; gate blocks (r,z,n) are
    contiguous along the 3H output (lane) axis."""
    gi = jnp.dot(x, w_in, preferred_element_type=jnp.float32,
                 precision=precision) + b_in
    gh = jnp.dot(h, w_hh, preferred_element_type=jnp.float32,
                 precision=precision) + b_hh
    r = jax.nn.sigmoid(gi[:, 0 * H:1 * H] + gh[:, 0 * H:1 * H])
    z = jax.nn.sigmoid(gi[:, 1 * H:2 * H] + gh[:, 1 * H:2 * H])
    n = jnp.tanh(gi[:, 2 * H:3 * H] + r * gh[:, 2 * H:3 * H])
    return (1.0 - z) * n + z * h


def _make_rnn_kernel(S, S_pad, P, D_m, D_g, D_p, D_e, with_alpha, precision,
                     pool_chunk):
    n_chunks = S_pad // pool_chunk

    def kernel(u_ref, qm_ref, watt_ref,
               g_win, g_whh, g_bin, g_bhh,
               p_win, p_whh, p_bin, p_bhh,
               e_win, e_whh, e_bin, e_bhh,
               *rest):
        if with_alpha:
            e_out, a_out = rest[0], rest[1]
            (g_hist, scale_hist, g_prev, q_state, e_state, xg_buf, xp_buf) = rest[2:]
        else:
            e_out, a_out = rest[0], None
            (g_hist, scale_hist, g_prev, q_state, e_state, xg_buf, xp_buf) = rest[1:]

        tb = u_ref.shape[1]

        # Fresh recurrent state for this batch tile.  g_hist must be zeroed and
        # scale_hist must be -inf-like so masked-away (future / padded) history
        # rows stay finite and contribute exactly 0 to the pooled context.
        g_hist[...] = jnp.zeros_like(g_hist)
        scale_hist[...] = jnp.full(scale_hist.shape, -1e30, scale_hist.dtype)
        g_prev[...] = jnp.zeros_like(g_prev)
        q_state[...] = jnp.zeros_like(q_state)
        e_state[...] = jnp.zeros_like(e_state)

        # Loop-invariant weights: load once, close over the values.
        w_att = watt_ref[...].astype(jnp.float32)                 # (1, D_g)
        gw = (g_win[...], g_whh[...], g_bin[...], g_bhh[...])
        pw = (p_win[...], p_whh[...], p_bin[...], p_bhh[...])
        ew = (e_win[...], e_whh[...], e_bin[...], e_bhh[...])

        def step(t, carry):
            u_t = u_ref[t].astype(jnp.float32)                    # (tb, D_m)
            qm_t = qm_ref[t].astype(jnp.float32)                  # (tb, P) one-hot
            e_prev = e_state[...]                                 # (tb, D_e)

            # _select_parties(q0, argmax(qmask)) for a one-hot speaker mask.
            q_sel_prev = jnp.zeros((tb, D_p), jnp.float32)
            for p in range(P):
                q_sel_prev = q_sel_prev + qm_t[:, p:p + 1] * q_state[pl.ds(p * tb, tb)]

            # ---- global GRU: g_t = GRU([U_t, q_sel, e_{t-1}], g_{t-1}) ----
            xg_buf[:, pl.ds(0, D_m)] = u_t
            xg_buf[:, pl.ds(D_m, D_p)] = q_sel_prev
            xg_buf[:, pl.ds(D_m + D_p, D_e)] = e_prev
            g_new = _gru_step(xg_buf[...], g_prev[...], *gw, H=D_g,
                              precision=precision)
            # TODO(synk): nn.Dropout is treated as identity (inference mode).
            g_hist[t] = g_new.astype(g_hist.dtype)
            g_prev[...] = g_new

            # ---- SimpleAttention over g_0..g_t, cached logits ----
            scale_hist[pl.ds(t, 1), :] = jnp.sum(g_new[None] * w_att[None], axis=-1)
            scale = scale_hist[...]                 # (S_pad, tb); future rows = -1e30
            m_max = jnp.max(scale, axis=0, keepdims=True)
            expv = jnp.exp(scale - m_max)
            denom = jnp.sum(expv, axis=0, keepdims=True)
            inv_denom = pl.reciprocal(denom, approx=False)

            # chunked alpha-weighted pooling over the history (bounded live range)
            def pool_body(c, acc):
                s0 = pl.multiple_of(c * pool_chunk, pool_chunk)
                h = g_hist[pl.ds(s0, pool_chunk)].astype(jnp.float32)
                a = jnp.exp(scale_hist[pl.ds(s0, pool_chunk)] - m_max) * inv_denom
                return acc + jnp.sum(a[:, :, None] * h, axis=0)
            gc = jax.lax.fori_loop(0, n_chunks, pool_body,
                                   jnp.zeros((tb, D_g), jnp.float32),
                                   unroll=n_chunks <= 8)

            # ---- party GRU, batched over parties (single hidden matmul) ----
            for p in range(P):
                rows = pl.ds(p * tb, tb)
                xp_buf[rows, pl.ds(0, D_m)] = u_t
                xp_buf[rows, pl.ds(D_m, D_g)] = gc
                xp_buf[rows, pl.ds(D_m + D_g, D_e)] = e_prev
            qs_all = _gru_step(xp_buf[...], q_state[...], *pw, H=D_p,
                               precision=precision)               # (P*tb, D_p)

            q_sel_new = jnp.zeros((tb, D_p), jnp.float32)
            for p in range(P):
                m_p = qm_t[:, p:p + 1]                            # (tb, 1)
                rows = pl.ds(p * tb, tb)
                q_new_p = (q_state[rows] * (1.0 - m_p)
                           + qs_all[p * tb:(p + 1) * tb] * m_p)   # listeners keep state
                q_state[rows] = q_new_p
                q_sel_new = q_sel_new + m_p * q_new_p             # _select_parties(q_, idx)

            # ---- emotion GRU ----
            e_new = _gru_step(q_sel_new, e_prev, *ew, H=D_e, precision=precision)
            e_state[...] = e_new

            e_out[t] = e_new.astype(e_out.dtype)                  # c_seq aliased in wrapper
            if with_alpha:
                alpha = (expv * inv_denom)[:S]                    # (S, tb)
                a_out[t] = jnp.transpose(alpha, (1, 0)).astype(a_out.dtype)
            return carry

        jax.lax.fori_loop(0, S, step, 0)

    return kernel


def _gru_params(key, d_in, d_hidden):
    """PyTorch-style GRUCell parameters."""
    k = 1.0 / math.sqrt(d_hidden)
    k0, k1, k2, k3 = jax.random.split(key, 4)
    return {
        "w_ih": jax.random.uniform(k0, (3 * d_hidden, d_in), jnp.float32, -k, k),
        "w_hh": jax.random.uniform(k1, (3 * d_hidden, d_hidden), jnp.float32, -k, k),
        "b_ih": jax.random.uniform(k2, (3 * d_hidden,), jnp.float32, -k, k),
        "b_hh": jax.random.uniform(k3, (3 * d_hidden,), jnp.float32, -k, k),
    }


def _gru_kernel_form(p):
    """PyTorch GRUCell params -> fused form: (d_in, 3H), (H, 3H), (1, 3H) x2."""
    h = p["w_hh"].shape[1]
    return (jnp.transpose(p["w_ih"]).astype(jnp.float32),
            jnp.transpose(p["w_hh"]).astype(jnp.float32),
            p["b_ih"].reshape(1, 3 * h).astype(jnp.float32),
            p["b_hh"].reshape(1, 3 * h).astype(jnp.float32))


def dialogue_rnn_forward(U, qmask, params, *, with_alpha=True, batch_tile=None,
                         mxu_precision=None, history_dtype=jnp.float32):
    """Fused DialogueRNN forward (party_attention=None, dropout = identity).

    U:     (seq_len, batch, D_m)
    qmask: (seq_len, batch, party) one-hot speaker mask (native layout)
    Returns (e_seq (S,B,D_e), c_seq == e_seq, alpha_seq (S,B,S) zero-padded or None).
    history_dtype=jnp.bfloat16 halves the g-history scratch on v6e/v7x.
    """
    S, B, D_m = U.shape
    P = qmask.shape[-1]
    D_g = params["g"]["w_hh"].shape[1]
    D_p = params["p"]["w_hh"].shape[1]
    D_e = params["e"]["w_hh"].shape[1]
    Kg, Kp = D_m + D_p + D_e, D_m + D_g + D_e

    pool_chunk = 8
    S_pad = _round_up(S, pool_chunk)

    g_win, g_whh, g_bin, g_bhh = _gru_kernel_form(params["g"])
    p_win, p_whh, p_bin, p_bhh = _gru_kernel_form(params["p"])
    e_win, e_whh, e_bin, e_bhh = _gru_kernel_form(params["e"])
    w_att = params["w_att"].astype(jnp.float32)                  # (1, D_g)

    budget, vmem_limit = _vmem_caps()
    hist_bytes = jnp.dtype(history_dtype).itemsize
    fixed = 2 * 4 * (Kg * 3 * D_g + D_g * 3 * D_g + Kp * 3 * D_p + D_p * 3 * D_p
                     + D_p * 3 * D_e + D_e * 3 * D_e
                     + 6 * (D_g + D_p + D_e) + D_g)
    per_col = (2 * 4 * S * (D_m + P)                 # double-buffered input blocks
               + 2 * 4 * S * D_e                     # resident e output (x2 buffers)
               + (2 * 4 * S * S if with_alpha else 0)
               + hist_bytes * S_pad * D_g            # g history scratch
               + 4 * (S_pad + D_g + P * D_p + D_e + Kg + P * Kp)
               + 4 * (3 * S_pad + pool_chunk * D_g   # live f32 working values
                      + 3 * (D_g + P * D_p + D_e) + D_g + D_m + S))
    tb = batch_tile if batch_tile is not None else _pick_batch_tile(
        B, per_col, fixed, budget)
    nb = pl.cdiv(B, tb)

    weights = [g_win, g_whh, g_bin, g_bhh,
               p_win, p_whh, p_bin, p_bhh,
               e_win, e_whh, e_bin, e_bhh]

    def _full_spec(a):
        zeros = (0,) * a.ndim
        return pl.BlockSpec(a.shape, lambda b: zeros)

    in_specs = ([pl.BlockSpec((S, tb, D_m), lambda b: (0, b, 0)),
                 pl.BlockSpec((S, tb, P), lambda b: (0, b, 0)),   # native (S,B,P) layout
                 _full_spec(w_att)]
                + [_full_spec(a) for a in weights])

    e_shape = jax.ShapeDtypeStruct((S, B, D_e), U.dtype)
    e_spec = pl.BlockSpec((S, tb, D_e), lambda b: (0, b, 0))      # VMEM-resident slab
    if with_alpha:
        out_shape = (e_shape, jax.ShapeDtypeStruct((S, B, S), U.dtype))
        out_specs = (e_spec, pl.BlockSpec((S, tb, S), lambda b: (0, b, 0)))
    else:
        out_shape = e_shape
        out_specs = e_spec

    scratch_shapes = [pltpu.VMEM((S_pad, tb, D_g), history_dtype),  # g history
                      pltpu.VMEM((S_pad, tb), jnp.float32),         # cached attn logits
                      pltpu.VMEM((tb, D_g), jnp.float32),           # g_{t-1}
                      pltpu.VMEM((P * tb, D_p), jnp.float32),       # party states
                      pltpu.VMEM((tb, D_e), jnp.float32),           # emotion state
                      pltpu.VMEM((tb, Kg), jnp.float32),            # g-cell input staging
                      pltpu.VMEM((P * tb, Kp), jnp.float32)]        # p-cell input staging

    kernel = _make_rnn_kernel(S, S_pad, P, D_m, D_g, D_p, D_e, with_alpha,
                              mxu_precision, pool_chunk)

    out = pl.pallas_call(
        kernel,
        out_shape=out_shape,
        grid=(nb,),
        in_specs=in_specs,
        out_specs=out_specs,
        scratch_shapes=scratch_shapes,
        compiler_params=pltpu.CompilerParams(
            dimension_semantics=("parallel",),         # batch tiles are independent
            vmem_limit_bytes=vmem_limit),
    )(U, qmask, w_att, *weights)

    if with_alpha:
        e_seq, alpha_seq = out
    else:
        e_seq, alpha_seq = out, None
    # In the module c_ == e_.detach(): alias instead of a second HBM writeback.
    return e_seq, e_seq, alpha_seq


# ---------------------------------------------------------------------------
# Pure-JAX reference of the PyTorch forward (dropout = identity)
# ---------------------------------------------------------------------------
def _gru_cell_reference(x, h, p):
    gi = jnp.dot(x, p["w_ih"].T, precision=_HIGHEST) + p["b_ih"]
    gh = jnp.dot(h, p["w_hh"].T, precision=_HIGHEST) + p["b_hh"]
    i_r, i_z, i_n = jnp.split(gi, 3, axis=1)
    h_r, h_z, h_n = jnp.split(gh, 3, axis=1)
    r = jax.nn.sigmoid(i_r + h_r)
    z = jax.nn.sigmoid(i_z + h_z)
    n = jnp.tanh(i_n + r * h_n)
    return (1.0 - z) * n + z * h


def _dialogue_rnn_reference(U, qmask, params):
    S, B, _ = U.shape
    P = qmask.shape[-1]
    D_g = params["g"]["w_hh"].shape[1]
    D_p = params["p"]["w_hh"].shape[1]
    D_e = params["e"]["w_hh"].shape[1]

    g_hist = []
    q = jnp.zeros((B, P, D_p), jnp.float32)
    e = jnp.zeros((B, D_e), jnp.float32)
    e_seq, c_seq, a_seq = [], [], []
    for t in range(S):
        U_t, qm_t = U[t], qmask[t]
        idx = jnp.argmax(qm_t, axis=1)
        q0_sel = q[jnp.arange(B), idx]
        e0_sel = e
        h_g = g_hist[-1] if g_hist else jnp.zeros((B, D_g), jnp.float32)
        g_ = _gru_cell_reference(jnp.concatenate([U_t, q0_sel, e0_sel], axis=1),
                                 h_g, params["g"])
        g_hist.append(g_)
        M = jnp.stack(g_hist, axis=0)                               # (t+1, B, D_g)
        scale = jnp.einsum("sbd,od->sbo", M, params["w_att"],
                           precision=_HIGHEST)[..., 0]
        alpha = jax.nn.softmax(scale, axis=0)                       # (t+1, B)
        gc = jnp.einsum("sb,sbd->bd", alpha, M, precision=_HIGHEST)
        x_p = jnp.concatenate([U_t, gc, e0_sel], axis=1)
        qs = jnp.stack([_gru_cell_reference(x_p, q[:, p, :], params["p"])
                        for p in range(P)], axis=1)
        q = q * (1.0 - qm_t[:, :, None]) + qs * qm_t[:, :, None]
        q_sel = q[jnp.arange(B), idx]
        e = _gru_cell_reference(q_sel, e0_sel, params["e"])
        e_seq.append(e)
        c_seq.append(e)
        a_seq.append(jnp.zeros((B, S), jnp.float32).at[:, : t + 1].set(alpha.T))
    return jnp.stack(e_seq), jnp.stack(c_seq), jnp.stack(a_seq)


if __name__ == "__main__":
    key = jax.random.PRNGKey(0)

    # ----- SimpleAttention kernel (the module's context attention) -----
    S_a, B_a, D_a = 8, 2, 32
    k_m, k_w, key = jax.random.split(key, 3)
    M = jax.random.normal(k_m, (S_a, B_a, D_a), dtype=jnp.float32)
    w = (jax.random.uniform(k_w, (1, D_a), dtype=jnp.float32) - 0.5) * (
        2.0 / jnp.sqrt(D_a))

    pool, alpha = simple_attention(M, w)
    pool_only = simple_attention(M, w, with_alpha=False)
    jax.block_until_ready((pool, alpha, pool_only))

    ref_pool, ref_alpha = _simple_attention_reference(M, w)
    assert pool.shape == (B_a, D_a) and alpha.shape == (B_a, 1, S_a)
    assert jnp.allclose(pool, ref_pool, atol=1e-5, rtol=1e-5)
    assert jnp.allclose(alpha, ref_alpha, atol=1e-5, rtol=1e-5)
    assert jnp.allclose(pool_only, ref_pool, atol=1e-5, rtol=1e-5)

    # ----- fused DialogueRNN forward -----
    S, B, P = 6, 2, 2
    D_m, D_g, D_p, D_e = 16, 24, 12, 8
    ks = jax.random.split(key, 6)
    U = jax.random.normal(ks[0], (S, B, D_m), dtype=jnp.float32)
    speaker = jax.random.randint(ks[1], (S, B), 0, P)
    qmask = jax.nn.one_hot(speaker, P, dtype=jnp.float32)            # (S, B, P)
    params = {
        "g": _gru_params(ks[2], D_m + D_p + D_e, D_g),
        "p": _gru_params(ks[3], D_m + D_g + D_e, D_p),
        "e": _gru_params(ks[4], D_p, D_e),
        "w_att": (jax.random.uniform(ks[5], (1, D_g), dtype=jnp.float32) - 0.5)
        * (2.0 / jnp.sqrt(D_g)),
    }

    ref_e, ref_c, ref_a = _dialogue_rnn_reference(U, qmask, params)

    # Tight numeric check: full-precision MXU passes inside the kernel.
    e_hi, c_hi, a_hi = dialogue_rnn_forward(
        U, qmask, params, mxu_precision=jax.lax.Precision.HIGHEST)
    jax.block_until_ready((e_hi, c_hi, a_hi))
    assert e_hi.shape == (S, B, D_e) and c_hi.shape == (S, B, D_e)
    assert a_hi.shape == (S, B, S)
    assert jnp.allclose(e_hi, ref_e, atol=2e-3, rtol=2e-3)
    assert jnp.allclose(c_hi, ref_c, atol=2e-3, rtol=2e-3)
    assert jnp.allclose(a_hi, ref_a, atol=2e-3, rtol=2e-3)

    # Production default: bf16-input / f32-accumulate MXU dots (no global
    # matmul-precision override), so only a loose check against the f32
    # reference (bf16 input rounding through a 3-GRU recurrence).
    e_df, c_df, a_df = dialogue_rnn_forward(U, qmask, params)
    e_na, c_na, a_na = dialogue_rnn_forward(U, qmask, params, with_alpha=False)
    jax.block_until_ready((e_df, c_df, a_df, e_na))
    assert a_na is None and c_na is e_na
    assert jnp.allclose(e_df, ref_e, atol=1e-1, rtol=1e-1)
    assert jnp.allclose(a_df, ref_a, atol=1e-1, rtol=1e-1)
    assert jnp.allclose(e_na, e_df, atol=1e-6, rtol=1e-6)

    print("KERNEL_OK")
</pallas_src>

<mosaic_0001>
module attributes {stable_mosaic.version = 11 : i64} {
  func.func @kernel(%arg0: i32, %arg1: memref<8x2x32xf32, #tpu.memory_space<vmem>>, %arg2: memref<1x32xf32, #tpu.memory_space<vmem>>, %arg3: memref<2x32xf32, #tpu.memory_space<vmem>>, %arg4: memref<2x8xf32, #tpu.memory_space<vmem>>, %arg5: memref<8x2xf32, #tpu.memory_space<vmem>>) attributes {dimension_semantics = [#tpu.dimension_semantics<parallel>], iteration_bounds = array<i64: 1>, scalar_prefetch = 0 : i64, scratch_operands = 1 : i64, tpu.core_type = #tpu.core_type<tc>, window_params = [{transform_indices = @transform_0, window_bounds = array<i64: 8, 2, 32>}, {pipeline_mode = #tpu.pipeline_mode<synchronous>, transform_indices = @transform_1, window_bounds = array<i64: 1, 32>}, {transform_indices = @transform_2, window_bounds = array<i64: 2, 32>}, {transform_indices = @transform_3, window_bounds = array<i64: 2, 8>}]} {
    %c0 = arith.constant 0 : index
    %c0_0 = arith.constant 0 : index
    %0 = vector.load %arg2[%c0, %c0_0] : memref<1x32xf32, #tpu.memory_space<vmem>>, vector<1x32xf32>
    %c0_i32 = arith.constant 0 : i32
    %c8_i32 = arith.constant 8 : i32
    %1 = arith.muli %c0_i32, %c8_i32 : i32
    %2 = tpu.assume_multiple %1, 8 : i32
    %3 = arith.index_cast %2 : i32 to index
    %c0_1 = arith.constant 0 : index
    %c0_2 = arith.constant 0 : index
    %4 = vector.load %arg1[%3, %c0_1, %c0_2] : memref<8x2x32xf32, #tpu.memory_space<vmem>>, vector<8x2x32xf32>
    %5 = vector.shape_cast %0 : vector<1x32xf32> to vector<1x1x32xf32>
    %6 = vector.broadcast %5 : vector<1x1x32xf32> to vector<8x2x32xf32>
    %7 = arith.mulf %4, %6 : vector<8x2x32xf32>
    %cst = arith.constant dense<0.000000e+00> : vector<8x2xf32>
    %8 = vector.multi_reduction <add>, %7, %cst [2] : vector<8x2x32xf32> to vector<8x2xf32>
    %9 = arith.index_cast %2 : i32 to index
    %c0_3 = arith.constant 0 : index
    %10 = vector.load %arg5[%9, %c0_3] : memref<8x2xf32, #tpu.memory_space<vmem>>, vector<8x2xf32>
    tpu.vector_store %arg5[%9, %c0_3], %8 {strides = array<i32>} : memref<8x2xf32, #tpu.memory_space<vmem>>, vector<8x2xf32>,
    %c1_i32 = arith.constant 1 : i32
    %c0_4 = arith.constant 0 : index
    %c0_5 = arith.constant 0 : index
    %11 = vector.load %arg5[%c0_4, %c0_5] : memref<8x2xf32, #tpu.memory_space<vmem>>, vector<8x2xf32>
    %cst_6 = arith.constant dense<0xFF800000> : vector<2xf32>
    %12 = vector.multi_reduction <maximumf>, %11, %cst_6 [0] : vector<8x2xf32> to vector<2xf32>
    %13 = vector.shape_cast %12 : vector<2xf32> to vector<1x2xf32>
    %14 = vector.broadcast %13 : vector<1x2xf32> to vector<8x2xf32>
    %15 = arith.subf %11, %14 : vector<8x2xf32>
    %16 = math.exp %15 : vector<8x2xf32>
    %cst_7 = arith.constant dense<0.000000e+00> : vector<2xf32>
    %17 = vector.multi_reduction <add>, %16, %cst_7 [0] : vector<8x2xf32> to vector<2xf32>
    %18 = vector.shape_cast %17 : vector<2xf32> to vector<1x2xf32>
    %19 = tpu.reciprocal %18 : vector<1x2xf32> -> vector<1x2xf32>
    %cst_8 = arith.constant 0.000000e+00 : f32
    %20 = vector.broadcast %cst_8 : f32 to vector<2x32xf32>
    %c0_i32_9 = arith.constant 0 : i32
    %c8_i32_10 = arith.constant 8 : i32
    %21 = arith.muli %c0_i32_9, %c8_i32_10 : i32
    %22 = tpu.assume_multiple %21, 8 : i32
    %23 = arith.index_cast %22 : i32 to index
    %c0_11 = arith.constant 0 : index
    %c0_12 = arith.constant 0 : index
    %24 = vector.load %arg1[%23, %c0_11, %c0_12] : memref<8x2x32xf32, #tpu.memory_space<vmem>>, vector<8x2x32xf32>
    %25 = arith.index_cast %22 : i32 to index
    %c0_13 = arith.constant 0 : index
    %26 = vector.load %arg5[%25, %c0_13] : memref<8x2xf32, #tpu.memory_space<vmem>>, vector<8x2xf32>
    %27 = vector.broadcast %13 : vector<1x2xf32> to vector<8x2xf32>
    %28 = arith.subf %26, %27 : vector<8x2xf32>
    %29 = math.exp %28 : vector<8x2xf32>
    %30 = vector.broadcast %19 : vector<1x2xf32> to vector<8x2xf32>
    %31 = arith.mulf %29, %30 : vector<8x2xf32>
    %32 = vector.shape_cast %31 : vector<8x2xf32> to vector<8x2x1xf32>
    %33 = vector.broadcast %32 : vector<8x2x1xf32> to vector<8x2x32xf32>
    %34 = arith.mulf %33, %24 : vector<8x2x32xf32>
    %cst_14 = arith.constant dense<0.000000e+00> : vector<2x32xf32>
    %35 = vector.multi_reduction <add>, %34, %cst_14 [0] : vector<8x2x32xf32> to vector<2x32xf32>
    %36 = arith.addf %20, %35 : vector<2x32xf32>
    %c1_i32_15 = arith.constant 1 : i32
    %c0_16 = arith.constant 0 : index
    %c0_17 = arith.constant 0 : index
    %37 = vector.load %arg3[%c0_16, %c0_17] : memref<2x32xf32, #tpu.memory_space<vmem>>, vector<2x32xf32>
    tpu.vector_store %arg3[%c0_16, %c0_17], %36 {strides = array<i32>} : memref<2x32xf32, #tpu.memory_space<vmem>>, vector<2x32xf32>,
    %38 = vector.broadcast %19 : vector<1x2xf32> to vector<8x2xf32>
    %39 = arith.mulf %16, %38 : vector<8x2xf32>
    %40 = tpu.transpose %39, [1, 0] : vector<8x2xf32> -> vector<2x8xf32>
    %c0_18 = arith.constant 0 : index
    %c0_19 = arith.constant 0 : index
    %41 = vector.load %arg4[%c0_18, %c0_19] : memref<2x8xf32, #tpu.memory_space<vmem>>, vector<2x8xf32>
    tpu.vector_store %arg4[%c0_18, %c0_19], %40 {strides = array<i32>} : memref<2x8xf32, #tpu.memory_space<vmem>>, vector<2x8xf32>,
    return
  }
  func.func @transform_0(%arg0: i32) -> (i32, i32, i32) {
    %c0_i32 = arith.constant 0 : i32
    %c0_i32_0 = arith.constant 0 : i32
    %c0_i32_1 = arith.constant 0 : i32
    return %c0_i32, %arg0, %c0_i32_0 : i32, i32, i32
  }
  func.func @transform_1(%arg0: i32) -> (i32, i32) {
    %c0_i32 = arith.constant 0 : i32
    %c0_i32_0 = arith.constant 0 : i32
    %c0_i32_1 = arith.constant 0 : i32
    return %c0_i32, %c0_i32_0 : i32, i32
  }
  func.func @transform_2(%arg0: i32) -> (i32, i32) {
    %c0_i32 = arith.constant 0 : i32
    %c0_i32_0 = arith.constant 0 : i32
    return %arg0, %c0_i32 : i32, i32
  }
  func.func @transform_3(%arg0: i32) -> (i32, i32) {
    %c0_i32 = arith.constant 0 : i32
    %c0_i32_0 = arith.constant 0 : i32
    return %arg0, %c0_i32 : i32, i32
  }
}

</mosaic_0001>

<llo_original>
// kernel: tpu_custom_call.1
$region0: #{tpu_custom_call.1}
  #allocation0 [shape = 'u32[]', space=smem, size = 0x4, offset = 0x4, fixed_abs, tag = 'smem constant byte address 0x4 - core index']
  #allocation1 [shape = 'u32[144,128]{1,0:T(1,128)}', space=vmem, size = 0x12000, scoped, tag = 'internal scratch']
  #allocation2 [shape = 'f32[8,2]{1,0:T(8,128)}', space=vmem, size = 0x1000, scoped, tag = 'scratch operand']
  %s0 = inlined_call_operand.hbm [shape: f32[8,2,32], index: 0, kind: input, shape index: {}]
  %s1 = inlined_call_operand.vmem [shape: f32[1,32], index: 1, kind: input, shape index: {}]
  %s2 = inlined_call_operand.hbm [shape: f32[2,32], index: 2, kind: output, shape index: {0}]
  %s3 = inlined_call_operand.hbm [shape: f32[2,8], index: 3, kind: output, shape index: {1}]
  %4 = xla_tuple %s2, %s3
  %s5 = sld [smem:[#allocation0]]
  $region30: #{tpu_custom_call.1} parent=0
    _
  %s7 = ssub.s32 1, %s5
  %s8 = scalar_select 0, %s7, %s5
  $region1: #{tpu_custom_call.1} parent=0
    #allocation3 [shape = 'u8[8192]{0}', space=vmem, size = 0x2000, scoped, tag = 'input window, operand 0, single buffered']
    #allocation4 [shape = 's32[1]{0}', space=sflag, size = 0x4, scoped, tag = 'scoped memory for tpu_custom_call.1']
    #allocation5 [shape = 's32[1]{0}', space=sflag, size = 0x4, scoped, tag = 'scoped memory for tpu_custom_call.1']
    #allocation6 [shape = 'u8[1024]{0}', space=vmem, size = 0x400, scoped, tag = 'output window, operand 0, single buffered']
    #allocation7 [shape = 'u8[1024]{0}', space=vmem, size = 0x400, scoped, tag = 'output window, operand 1, single buffered']
    #allocation8 [shape = 's32[1]{0}', space=sflag, size = 0x4, scoped, tag = 'scoped memory for tpu_custom_call.1']
    %9 = vsyncpa [#allocation4], 0
    %10 = vsyncpa [#allocation5], 0
    %11 = vsyncpa [#allocation8], 0
    // Predicated region
    $region2: #{tpu_custom_call.1} parent=1 // pred_check
      _
    $region3: #{tpu_custom_call.1} parent=1 // pred_check_branch
      %13 = sbr.rel (0) target = $region5
    $region4: #{tpu_custom_call.1} parent=1 // pred_region
      %s15 = ssub.s32 256, 256
      %16 = vsyncadd [#allocation4], %s15
      %s17 = sshll.u32 [#allocation3], 4
      %s18 = int_to_ptr.vmem [resolvable:$true] %s17
      %23 = dma.hbm_to_vmem [thread:$0]  %s0, 256, %s18, [#allocation4], 32, 32, 2
    $region5: #{tpu_custom_call.1} parent=1 // pred_fallthru
      _
    // Predicated region
    $region6: #{tpu_custom_call.1} parent=1 // pred_check
      _
    $region7: #{tpu_custom_call.1} parent=1 // pred_check_branch
      %25 = sbr.rel (0) target = $region9
    $region8: #{tpu_custom_call.1} parent=1 // pred_region
      _
    $region9: #{tpu_custom_call.1} parent=1 // pred_fallthru
      _
    // Predicated region
    $region10: #{tpu_custom_call.1} parent=1 // pred_check
      _
    $region11: #{tpu_custom_call.1} parent=1 // pred_check_branch
      %27 = sbr.rel (0) target = $region13
    $region12: #{tpu_custom_call.1} parent=1 // pred_region
      %28 = dma.done [#allocation4], 256
    $region13: #{tpu_custom_call.1} parent=1 // pred_fallthru
      _
    %v29 = vld [vmem:[%s1] sm:$0x1]
    %s30 = smul.u32 0, 2
    %s31 = scalar_lea.vmem [#allocation3], %s30
    %v32 = vld [vmem:[%s31] sm:$0x3]
    %v33 = vld [vmem:[%s31 + $0x2] sm:$0x3]
    %v34 = vld [vmem:[%s31 + $0x4] sm:$0x3]
    %v35 = vld [vmem:[%s31 + $0x6] sm:$0x3]
    %v36 = vld [vmem:[%s31 + $0x8] sm:$0x3]
    %v37 = vld [vmem:[%s31 + $0xa] sm:$0x3]
    %v38 = vld [vmem:[%s31 + $0xc] sm:$0x3]
    %v39 = vld [vmem:[%s31 + $0xe] sm:$0x3]
    %v41 = vlaneseq
    %v42 = vshrl.u32 %v41, 7
    %v43 = vsub.s32 0, %v42
    %v44 = vrot.slane %v29, %v43
    %v46 = vmul.f32 %v32, %v44
    %v47 = vmul.f32 %v33, %v44
    %v48 = vmul.f32 %v34, %v44
    %v49 = vmul.f32 %v35, %v44
    %v50 = vmul.f32 %v36, %v44
    %v51 = vmul.f32 %v37, %v44
    %v52 = vmul.f32 %v38, %v44
    %v53 = vmul.f32 %v39, %v44
    %vm54 = vcmask 254976
    %v55 = vsel %vm54, %v46, 0.0
    %56 = vadd.xlane.f32.xlu0 %v55
    %v57 = vpop.xlane.xlu0 %56
    %v58 = vsel %vm54, %v47, 0.0
    %59 = vadd.xlane.f32.xlu0 %v58
    %v60 = vpop.xlane.xlu0 %59
    %v61 = vsel %vm54, %v48, 0.0
    %62 = vadd.xlane.f32.xlu0 %v61
    %v63 = vpop.xlane.xlu0 %62
    %v64 = vsel %vm54, %v49, 0.0
    %65 = vadd.xlane.f32.xlu0 %v64
    %v66 = vpop.xlane.xlu0 %65
    %v67 = vsel %vm54, %v50, 0.0
    %68 = vadd.xlane.f32.xlu0 %v67
    %v69 = vpop.xlane.xlu0 %68
    %v70 = vsel %vm54, %v51, 0.0
    %71 = vadd.xlane.f32.xlu0 %v70
    %v72 = vpop.xlane.xlu0 %71
    %v73 = vsel %vm54, %v52, 0.0
    %74 = vadd.xlane.f32.xlu0 %v73
    %v75 = vpop.xlane.xlu0 %74
    %v76 = vsel %vm54, %v53, 0.0
    %77 = vadd.xlane.f32.xlu0 %v76
    %v78 = vpop.xlane.xlu0 %77
    %v87 = vlaneseq
    %v88 = vand.u32 %v87, 127
    %v89 = vlaneseq
    %v90 = vshrl.u32 %v89, 7
    %v91 = vsub.s32 %v88, %v90
    %v92 = vrot.slane %v57, %v91
    %v93 = vlaneseq
    %v94 = vshrl.u32 %v93, 7
    %v95 = vsub.s32 %v88, %v94
    %v96 = vrot.slane %v60, %v95
    %v97 = vlaneseq
    %v98 = vshrl.u32 %v97, 7
    %v99 = vsub.s32 %v88, %v98
    %v100 = vrot.slane %v63, %v99
    %v101 = vlaneseq
    %v102 = vshrl.u32 %v101, 7
    %v103 = vsub.s32 %v88, %v102
    %v104 = vrot.slane %v66, %v103
    %v105 = vlaneseq
    %v106 = vshrl.u32 %v105, 7
    %v107 = vsub.s32 %v88, %v106
    %v108 = vrot.slane %v69, %v107
    %v109 = vlaneseq
    %v110 = vshrl.u32 %v109, 7
    %v111 = vsub.s32 %v88, %v110
    %v112 = vrot.slane %v72, %v111
    %v113 = vlaneseq
    %v114 = vshrl.u32 %v113, 7
    %v115 = vsub.s32 %v88, %v114
    %v116 = vrot.slane %v75, %v115
    %v117 = vlaneseq
    %v118 = vshrl.u32 %v117, 7
    %v119 = vsub.s32 %v88, %v118
    %v120 = vrot.slane %v78, %v119
    %vm121 = vcmask 1041409
    %v122 = vsel %vm121, %v96, %v92
    %vm123 = vcmask 1042434
    %v124 = vsel %vm123, %v100, %v122
    %vm125 = vcmask 1043459
    %v126 = vsel %vm125, %v104, %v124
    %vm127 = vcmask 1044484
    %v128 = vsel %vm127, %v108, %v126
    %vm129 = vcmask 1045509
    %v130 = vsel %vm129, %v112, %v128
    %vm131 = vcmask 1046534
    %v132 = vsel %vm131, %v116, %v130
    %vm133 = vcmask 1047559
    %v134 = vsel %vm133, %v120, %v132
    %vm136 = vcmask 15360
    %137 = vst.msk [vmem:[#allocation2] sm:$0xff] %vm136, %v134
    %v138 = vld [vmem:[#allocation2] sm:$0xff]
    %v139 = vsel %vm136, %v138, -inf
    %v140 = vrot.slane %v139, 4
    %v141 = vmax.f32 %v139, %v140
    %v142 = vrot.slane %v141, 2
    %v143 = vmax.f32 %v141, %v142
    %v144 = vrot.slane %v143, 1
    %v145 = vmax.f32 %v143, %v144
    %v146 = vsub.f32 %v138, %v145
    %v147 = vmul.f32 %v146, 1.442695
    %v148 = vpow.pop %v147
    %v149 = vsel %vm136, %v148, 0.0
    %v150 = vrot.slane %v149, 4
    %v151 = vadd.f32 %v149, %v150
    %v152 = vrot.slane %v151, 2
    %v153 = vadd.f32 %v151, %v152
    %v154 = vrot.slane %v153, 1
    %v155 = vadd.f32 %v153, %v154
    %v156 = vrcp.pop %v155
    %v157 = vld [vmem:[%s31] sm:$0x3]
    %v158 = vld [vmem:[%s31 + $0x2] sm:$0x3]
    %v159 = vld [vmem:[%s31 + $0x4] sm:$0x3]
    %v160 = vld [vmem:[%s31 + $0x6] sm:$0x3]
    %v161 = vld [vmem:[%s31 + $0x8] sm:$0x3]
    %v162 = vld [vmem:[%s31 + $0xa] sm:$0x3]
    %v163 = vld [vmem:[%s31 + $0xc] sm:$0x3]
    %v164 = vld [vmem:[%s31 + $0xe] sm:$0x3]
    %v165 = vld [vmem:[#allocation2] sm:$0xff]
    %v166 = vsub.f32 %v165, %v145
    %v167 = vmul.f32 %v166, 1.442695
    %v168 = vpow.pop %v167
    %v169 = vmul.f32 %v168, %v156
    %v170 = vlaneseq
    %v171 = vshrl.u32 %v170, 7
    %v172 = vsub.s32 0, %v171
    %v173 = vrot.slane %v169, %v172
    %175 = vbcast.lane.b32.xlu0 %v173, 256
    %v176 = vpop.permute.xlu0 %175
    %v177 = vlaneseq
    %v178 = vshrl.u32 %v177, 7
    %v179 = vsub.s32 1, %v178
    %v180 = vrot.slane %v169, %v179
    %182 = vbcast.lane.b32.xlu0 %v180, 256
    %v183 = vpop.permute.xlu0 %182
    %v184 = vlaneseq
    %v185 = vshrl.u32 %v184, 7
    %v186 = vsub.s32 2, %v185
    %v187 = vrot.slane %v169, %v186
    %189 = vbcast.lane.b32.xlu0 %v187, 256
    %v190 = vpop.permute.xlu0 %189
    %v191 = vlaneseq
    %v192 = vshrl.u32 %v191, 7
    %v193 = vsub.s32 3, %v192
    %v194 = vrot.slane %v169, %v193
    %196 = vbcast.lane.b32.xlu0 %v194, 256
    %v197 = vpop.permute.xlu0 %196
    %v198 = vlaneseq
    %v199 = vshrl.u32 %v198, 7
    %v200 = vsub.s32 4, %v199
    %v201 = vrot.slane %v169, %v200
    %203 = vbcast.lane.b32.xlu0 %v201, 256
    %v204 = vpop.permute.xlu0 %203
    %v205 = vlaneseq
    %v206 = vshrl.u32 %v205, 7
    %v207 = vsub.s32 5, %v206
    %v208 = vrot.slane %v169, %v207
    %210 = vbcast.lane.b32.xlu0 %v208, 256
    %v211 = vpop.permute.xlu0 %210
    %v212 = vlaneseq
    %v213 = vshrl.u32 %v212, 7
    %v214 = vsub.s32 6, %v213
    %v215 = vrot.slane %v169, %v214
    %217 = vbcast.lane.b32.xlu0 %v215, 256
    %v218 = vpop.permute.xlu0 %217
    %v219 = vlaneseq
    %v220 = vshrl.u32 %v219, 7
    %v221 = vsub.s32 7, %v220
    %v222 = vrot.slane %v169, %v221
    %224 = vbcast.lane.b32.xlu0 %v222, 256
    %v225 = vpop.permute.xlu0 %224
    %v226 = vmul.f32 %v176, %v157
    %v227 = vmul.f32 %v183, %v158
    %v228 = vmul.f32 %v190, %v159
    %v229 = vmul.f32 %v197, %v160
    %v230 = vmul.f32 %v204, %v161
    %v231 = vmul.f32 %v211, %v162
    %v232 = vmul.f32 %v218, %v163
    %v233 = vmul.f32 %v225, %v164
    %v234 = vsel %vm54, %v226, 0.0
    %v235 = vsel %vm54, %v227, 0.0
    %v236 = vadd.f32 %v234, %v235
    %v237 = vsel %vm54, %v228, 0.0
    %v238 = vadd.f32 %v236, %v237
    %v239 = vsel %vm54, %v229, 0.0
    %v240 = vadd.f32 %v238, %v239
    %v241 = vsel %vm54, %v230, 0.0
    %v242 = vadd.f32 %v240, %v241
    %v243 = vsel %vm54, %v231, 0.0
    %v244 = vadd.f32 %v242, %v243
    %v245 = vsel %vm54, %v232, 0.0
    %v246 = vadd.f32 %v244, %v245
    %v247 = vsel %vm54, %v233, 0.0
    %v248 = vadd.f32 %v246, %v247
    %v249 = vadd.f32 %v248, 0.0
    %250 = vst.msk [vmem:[#allocation6] sm:$0x3] %vm54, %v249
    %v251 = vmul.f32 %v148, %v156
    %252 = vxpose.xlu0.b32.start [1/16] %v251, 128
    %253 = vxpose.xlu0.b32.cont [2/16] 0.0, 128
    %254 = vxpose.xlu0.b32.cont [3/16] 0.0, 128
    %255 = vxpose.xlu0.b32.cont [4/16] 0.0, 128
    %256 = vxpose.xlu0.b32.cont [5/16] 0.0, 128
    %257 = vxpose.xlu0.b32.cont [6/16] 0.0, 128
    %258 = vxpose.xlu0.b32.cont [7/16] 0.0, 128
    %259 = vxpose.xlu0.b32.cont [8/16] 0.0, 128
    %260 = vxpose.xlu0.b32.cont [9/16] 0.0, 128
    %261 = vxpose.xlu0.b32.cont [10/16] 0.0, 128
    %262 = vxpose.xlu0.b32.cont [11/16] 0.0, 128
    %263 = vxpose.xlu0.b32.cont [12/16] 0.0, 128
    %264 = vxpose.xlu0.b32.cont [13/16] 0.0, 128
    %265 = vxpose.xlu0.b32.cont [14/16] 0.0, 128
    %266 = vxpose.xlu0.b32.cont [15/16] 0.0, 128
    %267 = vxpose.xlu0.b32.end [16/16] 0.0, 128
    %v268 = vpop.trf.xlu0
    %v269 = vpop.trf.xlu0
    %v270 = vpop.trf.xlu0
    %v271 = vpop.trf.xlu0
    %v272 = vpop.trf.xlu0
    %v273 = vpop.trf.xlu0
    %v274 = vpop.trf.xlu0
    %v275 = vpop.trf.xlu0
    %v276 = vpop.trf.xlu0
    %v277 = vpop.trf.xlu0
    %v278 = vpop.trf.xlu0
    %v279 = vpop.trf.xlu0
    %v280 = vpop.trf.xlu0
    %v281 = vpop.trf.xlu0
    %v282 = vpop.trf.xlu0
    %v283 = vpop.trf.xlu0
    %vm284 = vcmask 58368
    %285 = vst.msk [vmem:[#allocation7] sm:$0x3] %vm284, %v268
    // Predicated region
    $region14: #{tpu_custom_call.1} parent=1 // pred_check
      _
    $region15: #{tpu_custom_call.1} parent=1 // pred_check_branch
      %287 = sbr.rel (0) target = $region17
    $region16: #{tpu_custom_call.1} parent=1 // pred_region
      %s289 = ssub.s32 32, 32
      %290 = vsyncadd [#allocation5], %s289
      %s292 = sshll.u32 [#allocation6], 4
      %s293 = int_to_ptr.vmem [resolvable:$true] %s292
      %295 = dma.vmem_to_hbm [thread:$0]  %s293, 32, %s2, [#allocation5]
    $region17: #{tpu_custom_call.1} parent=1 // pred_fallthru
      _
    // Predicated region
    $region18: #{tpu_custom_call.1} parent=1 // pred_check
      _
    $region19: #{tpu_custom_call.1} parent=1 // pred_check_branch
      %297 = sbr.rel (0) target = $region21
    $region20: #{tpu_custom_call.1} parent=1 // pred_region
      %s299 = ssub.s32 32, 32
      %300 = vsyncadd [#allocation8], %s299
      %s302 = sshll.u32 [#allocation7], 4
      %s303 = int_to_ptr.vmem [resolvable:$true] %s302
      %305 = dma.vmem_to_hbm [thread:$0]  %s303, 32, %s3, [#allocation8]
    $region21: #{tpu_custom_call.1} parent=1 // pred_fallthru
      _
    // Predicated region
    $region22: #{tpu_custom_call.1} parent=1 // pred_check
      _
    $region23: #{tpu_custom_call.1} parent=1 // pred_check_branch
      %307 = sbr.rel (0) target = $region25
    $region24: #{tpu_custom_call.1} parent=1 // pred_region
      %308 = dma.done [#allocation5], 32
    $region25: #{tpu_custom_call.1} parent=1 // pred_fallthru
      _
    // Predicated region
    $region26: #{tpu_custom_call.1} parent=1 // pred_check
      _
    $region27: #{tpu_custom_call.1} parent=1 // pred_check_branch
      %310 = sbr.rel (0) target = $region29
    $region28: #{tpu_custom_call.1} parent=1 // pred_region
      %311 = dma.done [#allocation8], 32
    $region29: #{tpu_custom_call.1} parent=1 // pred_fallthru
      _
    %312 = vsyncpa [#allocation4], 1
    %313 = vsyncpa [#allocation5], 1
    %314 = vsyncpa [#allocation8], 1

</llo_original>
